<compile_context>
chip_gen: v7x
topology: tpu7x:2x2x1
jax: 0.10.0
libtpu: 0.0.40
codegen_flags: <defaults>
</compile_context>

<pallas_src>
import math
import functools

import numpy as np
import jax
import jax.numpy as jnp
from jax.experimental import pallas as pl
from jax.experimental.pallas import tpu as pltpu

EPS = 1e-5

# Tap offsets of the two circular branches:
#   dilation 1, padding 3 -> offsets k-3   (k=0..6)  = {-3..3}
#   dilation 2, padding 6 -> offsets 2k-6  (k=0..6)  = {-6,-4,-2,0,2,4,6}
OFF_A = tuple(k - 3 for k in range(7))
OFF_B = tuple(2 * k - 6 for k in range(7))
CIRC_OFFSETS = tuple(sorted(set(OFF_A) | set(OFF_B)))   # 11 offsets (+-5 unused)
MIX_OFFSETS = (-1, 0, 1)                                # mix conv: k=3, zero pad 1


def _ceil(n, m):
    return ((n + m - 1) // m) * m


# ----------------------------------------------------------------------------
# One-time probe: pin down pltpu.roll's shift sign convention.
# ----------------------------------------------------------------------------
@functools.lru_cache(maxsize=None)
def _roll_sign():
    def k(x_ref, o_ref):
        o_ref[...] = pltpu.roll(x_ref[...], 1, axis=1)

    x = jnp.broadcast_to(jnp.arange(128, dtype=jnp.float32), (8, 128))
    y = pl.pallas_call(k, out_shape=jax.ShapeDtypeStruct((8, 128), jnp.float32))(x)
    v = int(y[0, 0])
    if v == 127:
        return 1      # jnp.roll convention: out[i] = x[(i - shift) % n]
    if v == 1:
        return -1     # opposite convention: out[i] = x[(i + shift) % n]
    raise RuntimeError(f"unexpected pltpu.roll probe value: {v}")


# ----------------------------------------------------------------------------
# Pallas kernel
# ----------------------------------------------------------------------------
def _evo_kernel(x_ref, mask_ref,
                w1_ref, b1_ref, g1_ref, be1_ref,
                w2_ref, b2_ref, g2_ref, be2_ref,
                w3_ref, b3_ref, g3_ref, be3_ref,
                w4_ref, b4_ref, g4_ref, be4_ref,
                wm_ref, bm_ref,
                o_ref, *, seq_len, n_valid, mm_dtype, roll_sign):
    L = seq_len
    width = o_ref.shape[1]                 # N * L_pad (multiple of 128)
    mask = mask_ref[...]                   # (1, width) f32, 1.0 on real lanes
    inv_cnt = 1.0 / float(n_valid)

    def gterm(h16, s):
        # out[:, p] = h16[:, (p + s) mod width]  (XLU lane rotation).
        # Each sequence segment has L_pad >= 2L+6 lanes with the trailing lanes
        # exactly zero, so every REAL output lane receives either the intended
        # in-sequence value or an exact zero; summing the straight and wrapped
        # terms reconstructs circular indexing with no per-batch slicing.
        s = s % width
        if s == 0:
            return h16
        shift = (-s if roll_sign == 1 else s) % width
        return pltpu.roll(h16, shift, axis=1)

    def conv(h, w_ref, b_ref, offsets, circular):
        h16 = h.astype(mm_dtype)           # cast ONCE, before any shifting
        acc = None
        for idx, off in enumerate(offsets):
            op = gterm(h16, off)
            if circular and off > 0:
                op = op + gterm(h16, off - L)      # wrap term (disjoint support)
            elif circular and off < 0:
                op = op + gterm(h16, off + L)
            y = jnp.dot(w_ref[idx], op, preferred_element_type=jnp.float32)
            acc = y if acc is None else acc + y
        return acc + b_ref[...]             # bias broadcast, f32

    def layer(h, w_ref, b_ref, g_ref, be_ref):
        # conv + ReLU; mask re-zeros pad lanes so BN sums are exact.
        z = jnp.maximum(conv(h, w_ref, b_ref, CIRC_OFFSETS, True), 0.0) * mask
        # Single-pass BatchNorm1d (training-mode biased stats over N*L).
        s1 = jnp.sum(z, axis=1, keepdims=True)
        s2 = jnp.sum(z * z, axis=1, keepdims=True)
        mean = s1 * inv_cnt
        var = jnp.maximum(s2 * inv_cnt - mean * mean, 0.0)
        scale = g_ref[...] * jax.lax.rsqrt(var + EPS)
        shift = be_ref[...] - mean * scale
        return z * scale + shift * mask     # pad lanes stay exactly zero

    x = x_ref[...]                          # (C0p, width) f32, zero-padded
    h = layer(x, w1_ref, b1_ref, g1_ref, be1_ref)
    h = layer(h, w2_ref, b2_ref, g2_ref, be2_ref)
    h = layer(h, w3_ref, b3_ref, g3_ref, be3_ref)
    h = layer(h, w4_ref, b4_ref, g4_ref, be4_ref)
    # Mix conv (zero padding).  Its weight/bias rows beyond `ch` are zero, so
    # adding the padded input x yields [out + residual ; mode ; 0] directly.
    o_ref[...] = conv(h, wm_ref, bm_ref, MIX_OFFSETS, False) + x


# ----------------------------------------------------------------------------
# Wrapper: layout/padding + weight packing (host-side glue) + pallas_call
# ----------------------------------------------------------------------------
def evo_block_forward(x, params, matmul_dtype=jnp.bfloat16):
    """x: (N, ch+2, L) float32 (PyTorch NCL layout).  Returns (N, ch+2, L)."""
    N, C, L = x.shape
    ch = C - 2

    c1 = int(params["c11"][0].shape[0])     # conv1 out channels per branch
    c2 = int(params["c21"][0].shape[0])     # conv2..4 out channels per branch
    c0 = ch + 2
    c0p, c1p, c2p = _ceil(c0, 16), _ceil(c1, 16), _ceil(c2, 16)

    # Per-sequence lane segment: 128-dense and large enough for the roll trick.
    Lp = _ceil(2 * L + 6, 128)
    assert Lp >= 2 * L + 6
    W = N * Lp

    # Activation: (C0p, N*Lp); rows [0:ch]=residual, [ch:ch+2]=mode, rest zero;
    # per segment, lanes [0:L] are real, the rest exact zeros.
    xt = jnp.transpose(x, (1, 0, 2))                          # (C, N, L)
    xt = jnp.pad(xt, ((0, c0p - C), (0, 0), (0, Lp - L)))     # (C0p, N, Lp)
    x2 = xt.reshape(c0p, W)

    mnp = np.zeros((N, Lp), np.float32)
    mnp[:, :L] = 1.0
    mask = jnp.asarray(mnp.reshape(1, W))

    # real-channel -> padded-row maps for each layer's *input*
    in_map0 = np.arange(c0)
    in_map1 = np.concatenate([np.arange(c1), c1p + np.arange(c1)])
    in_map2 = np.concatenate([np.arange(c2), c2p + np.arange(c2)])

    f32 = np.float32

    def pack_pair(pA, pB, in_map, cinp, coutp):
        # Per-offset weight slices for both branches: (n_off, 2*coutp, cinp).
        wA, bA = (np.asarray(t, f32) for t in pA)
        wB, bB = (np.asarray(t, f32) for t in pB)
        cA, cB = wA.shape[0], wB.shape[0]
        cols = np.asarray(in_map)
        Wk = np.zeros((len(CIRC_OFFSETS), 2 * coutp, cinp), f32)
        for idx, off in enumerate(CIRC_OFFSETS):
            if off in OFF_A:                                   # dilation-1 tap
                Wk[idx, np.arange(cA)[:, None], cols[None, :]] = wA[:, :, off + 3]
            if off in OFF_B:                                   # dilation-2 tap
                Wk[idx, coutp + np.arange(cB)[:, None], cols[None, :]] = \
                    wB[:, :, (off + 6) // 2]
        b = np.zeros((2 * coutp, 1), f32)
        b[:cA, 0] = bA
        b[coutp:coutp + cB, 0] = bB
        return jnp.asarray(Wk, matmul_dtype), jnp.asarray(b)

    def pack_bn(pbn, c_real, coutp):
        g, be = (np.asarray(t, f32) for t in pbn)
        G = np.zeros((2 * coutp, 1), f32)
        B = np.zeros((2 * coutp, 1), f32)
        G[:c_real, 0] = g[:c_real]
        G[coutp:coutp + c_real, 0] = g[c_real:]
        B[:c_real, 0] = be[:c_real]
        B[coutp:coutp + c_real, 0] = be[c_real:]
        return jnp.asarray(G), jnp.asarray(B)

    def pack_mix(pmix, in_map, cinp, coutp):
        w, b = (np.asarray(t, f32) for t in pmix)
        co = w.shape[0]
        cols = np.asarray(in_map)
        Wk = np.zeros((len(MIX_OFFSETS), coutp, cinp), f32)
        for idx, off in enumerate(MIX_OFFSETS):
            Wk[idx, np.arange(co)[:, None], cols[None, :]] = w[:, :, off + 1]
        B = np.zeros((coutp, 1), f32)
        B[:co, 0] = b
        return jnp.asarray(Wk, matmul_dtype), jnp.asarray(B)

    w1, b1 = pack_pair(params["c11"], params["c12"], in_map0, c0p, c1p)
    g1, be1 = pack_bn(params["bn1"], c1, c1p)
    w2, b2 = pack_pair(params["c21"], params["c22"], in_map1, 2 * c1p, c2p)
    g2, be2 = pack_bn(params["bn2"], c2, c2p)
    w3, b3 = pack_pair(params["c31"], params["c32"], in_map2, 2 * c2p, c2p)
    g3, be3 = pack_bn(params["bn3"], c2, c2p)
    w4, b4 = pack_pair(params["c41"], params["c42"], in_map2, 2 * c2p, c2p)
    g4, be4 = pack_bn(params["bn4"], c2, c2p)
    wm, bm = pack_mix(params["mix"], in_map2, 2 * c2p, c0p)

    inputs = [x2, mask,
              w1, b1, g1, be1,
              w2, b2, g2, be2,
              w3, b3, g3, be3,
              w4, b4, g4, be4,
              wm, bm]

    # Per-generation VMEM budget (~48 MiB on v7x, ~96 MiB on v5e/v6e).
    try:
        phys = int(pltpu.get_tpu_info().vmem_capacity_bytes)
        vmem_limit = min(3 * phys // 4, 100 * 1024 * 1024)
    except Exception:
        vmem_limit = 48 * 1024 * 1024

    vmem = pl.BlockSpec(memory_space=pltpu.MemorySpace.VMEM)
    out2 = pl.pallas_call(
        functools.partial(_evo_kernel, seq_len=L, n_valid=N * L,
                          mm_dtype=matmul_dtype, roll_sign=_roll_sign()),
        out_shape=jax.ShapeDtypeStruct((c0p, W), jnp.float32),
        in_specs=[vmem] * len(inputs),
        out_specs=vmem,
        compiler_params=pltpu.CompilerParams(vmem_limit_bytes=vmem_limit),
    )(*inputs)

    out3 = out2.reshape(c0p, N, Lp)[:C, :, :L]
    return jnp.transpose(out3, (1, 0, 2))


# ----------------------------------------------------------------------------
# Deterministic parameter init (shapes from Evo_Block.__init__)
# ----------------------------------------------------------------------------
def init_params(key, factor, ch):
    c1 = math.floor(8 * factor)
    c2 = math.floor(10 * factor)

    def conv_p(k, cout, cin, ksz):
        kw, kb = jax.random.split(k)
        bound = 1.0 / math.sqrt(cin * ksz)
        w = jax.random.uniform(kw, (cout, cin, ksz), jnp.float32, -bound, bound)
        b = jax.random.uniform(kb, (cout,), jnp.float32, -bound, bound)
        return w, b

    def bn_p(k, c):
        kg, kb = jax.random.split(k)
        g = 1.0 + 0.1 * jax.random.normal(kg, (c,), jnp.float32)
        be = 0.1 * jax.random.normal(kb, (c,), jnp.float32)
        return g, be

    keys = iter(jax.random.split(key, 16))
    p = {}
    p["c11"] = conv_p(next(keys), c1, ch + 2, 7)
    p["c12"] = conv_p(next(keys), c1, ch + 2, 7)
    p["bn1"] = bn_p(next(keys), 2 * c1)
    p["c21"] = conv_p(next(keys), c2, 2 * c1, 7)
    p["c22"] = conv_p(next(keys), c2, 2 * c1, 7)
    p["bn2"] = bn_p(next(keys), 2 * c2)
    p["c31"] = conv_p(next(keys), c2, 2 * c2, 7)
    p["c32"] = conv_p(next(keys), c2, 2 * c2, 7)
    p["bn3"] = bn_p(next(keys), 2 * c2)
    p["c41"] = conv_p(next(keys), c2, 2 * c2, 7)
    p["c42"] = conv_p(next(keys), c2, 2 * c2, 7)
    p["bn4"] = bn_p(next(keys), 2 * c2)
    p["mix"] = conv_p(next(keys), ch, 2 * c2, 3)
    return p


# ----------------------------------------------------------------------------
# Pure-JAX reference (f32, NCL layout, roll-based circular conv) for validation
# ----------------------------------------------------------------------------
def _ref_conv(x, w, b, dilation, pad, circular):
    N, Cin, L = x.shape
    Cout, _, K = w.shape
    y = jnp.zeros((N, Cout, L), jnp.float32) + b[None, :, None]
    if circular:
        for k in range(K):
            off = k * dilation - pad
            xs = jnp.roll(x, shift=-off, axis=2)
            y = y + jnp.einsum("ncl,oc->nol", xs, w[:, :, k])
    else:
        xp = jnp.pad(x, ((0, 0), (0, 0), (pad, pad)))
        for k in range(K):
            y = y + jnp.einsum("ncl,oc->nol",
                               xp[:, :, k * dilation:k * dilation + L], w[:, :, k])
    return y


def _ref_bn(x, gamma, beta):
    mean = jnp.mean(x, axis=(0, 2), keepdims=True)
    var = jnp.mean((x - mean) ** 2, axis=(0, 2), keepdims=True)
    return gamma[None, :, None] * (x - mean) * jax.lax.rsqrt(var + EPS) + beta[None, :, None]


def _ref_forward(x, p):
    relu = lambda z: jnp.maximum(z, 0.0)
    residual = x[:, :-2]
    mode = x[:, -2:]
    h = jnp.concatenate([relu(_ref_conv(x, *p["c11"], 1, 3, True)),
                         relu(_ref_conv(x, *p["c12"], 2, 6, True))], axis=1)
    h = _ref_bn(h, *p["bn1"])
    h = jnp.concatenate([relu(_ref_conv(h, *p["c21"], 1, 3, True)),
                         relu(_ref_conv(h, *p["c22"], 2, 6, True))], axis=1)
    h = _ref_bn(h, *p["bn2"])
    h = jnp.concatenate([relu(_ref_conv(h, *p["c31"], 1, 3, True)),
                         relu(_ref_conv(h, *p["c32"], 2, 6, True))], axis=1)
    h = _ref_bn(h, *p["bn3"])
    h = jnp.concatenate([relu(_ref_conv(h, *p["c41"], 1, 3, True)),
                         relu(_ref_conv(h, *p["c42"], 2, 6, True))], axis=1)
    h = _ref_bn(h, *p["bn4"])
    out = _ref_conv(h, *p["mix"], 1, 1, False) + residual
    return jnp.concatenate([out, mode], axis=1)


if __name__ == "__main__":
    factor, ch = 1, 4          # conv1_out_ch = 8, conv2_out_ch = 10
    N, L = 2, 16               # batch = 2, sequence length = 16
    key = jax.random.PRNGKey(0)
    kx, kp = jax.random.split(key)
    x = jax.random.normal(kx, (N, ch + 2, L), dtype=jnp.float32)
    params = init_params(kp, factor, ch)

    ref = _ref_forward(x, params)

    # f32-matmul path: structural-correctness check against the f32 reference.
    out_f32 = jax.block_until_ready(
        evo_block_forward(x, params, matmul_dtype=jnp.float32))
    assert out_f32.shape == (N, ch + 2, L), out_f32.shape
    err_f32 = float(jnp.max(jnp.abs(out_f32 - ref)))
    assert err_f32 < 5e-2, f"f32 path max abs error vs reference: {err_f32}"

    # Default bf16-matmul path (MXU-friendly): looser tolerance, since bf16
    # operand rounding compounds through 4 BatchNorm layers.
    out_bf16 = jax.block_until_ready(evo_block_forward(x, params))
    assert out_bf16.shape == (N, ch + 2, L), out_bf16.shape
    err_bf16 = float(jnp.max(jnp.abs(out_bf16 - ref)))
    assert err_bf16 < 1e-1, f"bf16 path max abs error vs reference: {err_bf16}"

    print("KERNEL_OK")
</pallas_src>

<mosaic_0001>
module attributes {stable_mosaic.version = 11 : i64} {
  func.func @k(%arg0: memref<8x128xf32, #tpu.memory_space<vmem>>, %arg1: memref<8x128xf32, #tpu.memory_space<vmem>>) attributes {dimension_semantics = [], scalar_prefetch = 0 : i64, scratch_operands = 0 : i64, tpu.core_type = #tpu.core_type<tc>} {
    %c0 = arith.constant 0 : index
    %c0_0 = arith.constant 0 : index
    %0 = vector.load %arg0[%c0, %c0_0] : memref<8x128xf32, #tpu.memory_space<vmem>>, vector<8x128xf32>
    %c1_i32 = arith.constant 1 : i32
    %1 = tpu.dynamic_rotate %0 by %c1_i32 dim 1 : vector<8x128xf32>, i32 -> vector<8x128xf32>
    %c0_1 = arith.constant 0 : index
    %c0_2 = arith.constant 0 : index
    %2 = vector.load %arg1[%c0_1, %c0_2] : memref<8x128xf32, #tpu.memory_space<vmem>>, vector<8x128xf32>
    tpu.vector_store %arg1[%c0_1, %c0_2], %1 {strides = array<i32>} : memref<8x128xf32, #tpu.memory_space<vmem>>, vector<8x128xf32>,
    return
  }
}

</mosaic_0001>

<llo_original>
// kernel: tpu_custom_call.1
$region0: #{tpu_custom_call.1}
  #allocation0 [shape = 'u32[]', space=smem, size = 0x4, offset = 0x4, fixed_abs, tag = 'smem constant byte address 0x4 - core index']
  #allocation1 [shape = 'u32[144,128]{1,0:T(1,128)}', space=vmem, size = 0x12000, scoped, tag = 'internal scratch']
  %s0 = inlined_call_operand.hbm [shape: f32[8,128], index: 0, kind: input, shape index: {}]
  %s1 = inlined_call_operand.hbm [shape: f32[8,128], index: 1, kind: output, shape index: {}]
  %s2 = sld [smem:[#allocation0]]
  $region18: #{tpu_custom_call.1} parent=0
    _
  %s4 = ssub.s32 1, %s2
  %s5 = scalar_select 0, %s4, %s2
  $region1: #{tpu_custom_call.1} parent=0
    #allocation2 [shape = 'u8[4096]{0}', space=vmem, size = 0x1000, scoped, tag = 'input window, operand 0, single buffered']
    #allocation3 [shape = 's32[1]{0}', space=sflag, size = 0x4, scoped, tag = 'scoped memory for tpu_custom_call.1']
    #allocation4 [shape = 's32[1]{0}', space=sflag, size = 0x4, scoped, tag = 'scoped memory for tpu_custom_call.1']
    #allocation5 [shape = 'u8[4096]{0}', space=vmem, size = 0x1000, scoped, tag = 'output window, operand 0, single buffered']
    %6 = vsyncpa [#allocation3], 0
    %7 = vsyncpa [#allocation4], 0
    // Predicated region
    $region2: #{tpu_custom_call.1} parent=1 // pred_check
      _
    $region3: #{tpu_custom_call.1} parent=1 // pred_check_branch
      %9 = sbr.rel (0) target = $region5
    $region4: #{tpu_custom_call.1} parent=1 // pred_region
      %s11 = ssub.s32 128, 128
      %12 = vsyncadd [#allocation3], %s11
      %s14 = sshll.u32 [#allocation2], 4
      %s15 = int_to_ptr.vmem [resolvable:$true] %s14
      %17 = dma.hbm_to_vmem [thread:$0]  %s0, 128, %s15, [#allocation3]
    $region5: #{tpu_custom_call.1} parent=1 // pred_fallthru
      _
    // Predicated region
    $region6: #{tpu_custom_call.1} parent=1 // pred_check
      _
    $region7: #{tpu_custom_call.1} parent=1 // pred_check_branch
      %19 = sbr.rel (0) target = $region9
    $region8: #{tpu_custom_call.1} parent=1 // pred_region
      %20 = dma.done [#allocation3], 128
    $region9: #{tpu_custom_call.1} parent=1 // pred_fallthru
      _
    %v21 = vld [vmem:[#allocation2] sm:$0xff]
    %22 = vrot.lane.b32.xlu0 %v21, 1
    %v23 = vpop.permute.xlu0 %22
    %24 = vst [vmem:[#allocation5] sm:$0xff] %v23
    // Predicated region
    $region10: #{tpu_custom_call.1} parent=1 // pred_check
      _
    $region11: #{tpu_custom_call.1} parent=1 // pred_check_branch
      %26 = sbr.rel (0) target = $region13
    $region12: #{tpu_custom_call.1} parent=1 // pred_region
      %s28 = ssub.s32 128, 128
      %29 = vsyncadd [#allocation4], %s28
      %s31 = sshll.u32 [#allocation5], 4
      %s32 = int_to_ptr.vmem [resolvable:$true] %s31
      %34 = dma.vmem_to_hbm [thread:$0]  %s32, 128, %s1, [#allocation4]
    $region13: #{tpu_custom_call.1} parent=1 // pred_fallthru
      _
    // Predicated region
    $region14: #{tpu_custom_call.1} parent=1 // pred_check
      _
    $region15: #{tpu_custom_call.1} parent=1 // pred_check_branch
      %36 = sbr.rel (0) target = $region17
    $region16: #{tpu_custom_call.1} parent=1 // pred_region
      %37 = dma.done [#allocation4], 128
    $region17: #{tpu_custom_call.1} parent=1 // pred_fallthru
      _
    %38 = vsyncpa [#allocation3], 1
    %39 = vsyncpa [#allocation4], 1

</llo_original>
